<compile_context>
chip_gen: v6e
topology: v6e:2x2x1
jax: 0.10.0
libtpu: 0.0.40
codegen_flags: <defaults>
</compile_context>

<pallas_src>
import jax
import jax.numpy as jnp
from jax.experimental import pallas as pl
from jax.experimental.pallas import tpu as pltpu


def _max_pool_kernel(x_ref, o_ref):
    """x_ref: (rows_blk, T, D) -> o_ref: (rows_blk, D), max over the tweet axis."""
    t = x_ref.shape[1]
    if t <= 32:
        # Unrolled element-wise max chain: stays on the VPU (VALU slots have
        # slack in this HBM-bound kernel) rather than an XLU sublane reduce.
        acc = x_ref[:, 0, :]
        for i in range(1, t):
            acc = jnp.maximum(acc, x_ref[:, i, :])
    else:
        acc = jnp.max(x_ref[...], axis=1)
    o_ref[...] = acc


def _choose_row_block(rows, t, d, itemsize):
    """Rows per grid step.

    Big enough to amortize per-step overhead (target up to 1024 rows), small
    enough that double-buffered input (+ output) stays well inside VMEM even
    on v7x, and yielding >= 4 blocks for large inputs so both v7x TensorCores
    get work on the "parallel" grid axis.
    """
    bytes_per_row = (t + 1) * d * itemsize
    vmem_cap_rows = max(8, (4 << 20) // bytes_per_row)  # ~8 MiB double-buffered
    target = min(1024, vmem_cap_rows)
    if rows <= target:
        return rows                       # single block, full extent
    rb = min(target, pl.cdiv(rows, 4))    # keep >= 4 blocks for megacore
    return max(8, (rb // 8) * 8)          # multiple of 8 -> clean (rb, D) tile


def pooling_forward(inputs, dim, lag, *, force_pallas=False):
    """JAX/Pallas equivalent of pooling.forward.

    inputs: tuple/list whose first element is the tweet tensor of shape
            (B, lag, T, dim).  Returns (B, lag, dim): element-wise max over T.
    """
    x = inputs[0]
    B, L, T, D = x.shape
    assert L == lag and D == dim, "shape must match module config (lag, dim)"

    rows = B * L
    itemsize = jnp.dtype(x.dtype).itemsize

    # Tiny problems: a standalone pallas_call's fixed launch/pipeline cost
    # exceeds the entire data movement; let XLA fuse a plain reduce instead.
    if not force_pallas and x.size * itemsize < (1 << 20):
        return jnp.max(x, axis=2)

    x_flat = x.reshape(rows, T, D)        # free row-major metadata reshape
    rb = _choose_row_block(rows, T, D, itemsize)
    num_blocks = pl.cdiv(rows, rb)        # ragged last block: OOB rows read as
                                          # padding, their outputs are dropped.

    cost = pl.CostEstimate(
        flops=rows * max(T - 1, 0) * D,
        transcendentals=0,
        bytes_accessed=rows * T * D * itemsize + rows * D * itemsize,
    )

    out_flat = pl.pallas_call(
        _max_pool_kernel,
        out_shape=jax.ShapeDtypeStruct((rows, D), x.dtype),
        grid=(num_blocks,),
        in_specs=[pl.BlockSpec((rb, T, D), lambda i: (i, 0, 0))],
        out_specs=pl.BlockSpec((rb, D), lambda i: (i, 0)),
        compiler_params=pltpu.CompilerParams(
            dimension_semantics=("parallel",),
        ),
        cost_estimate=cost,
    )(x_flat)
    return out_flat.reshape(B, L, D)


if __name__ == "__main__":
    key = jax.random.PRNGKey(0)
    k0, k1 = jax.random.split(key)

    # Production-like shape: lane-dense feature dim (multiple of 128).
    dim, lag, B, T = 128, 5, 8, 8
    x = jax.random.normal(k0, (B, lag, T, dim), dtype=jnp.float32)
    out = pooling_forward((x,), dim=dim, lag=lag, force_pallas=True)
    out = jax.block_until_ready(out)
    ref = jnp.max(x, axis=2)
    assert out.shape == (B, lag, dim)
    assert jnp.allclose(out, ref), "Pallas output mismatch vs reference (D=128)"

    # Narrow feature dim (the original toy config) through the kernel path.
    dim2, lag2, B2, T2 = 32, 5, 2, 8
    x2 = jax.random.normal(k1, (B2, lag2, T2, dim2), dtype=jnp.float32)
    out2 = jax.block_until_ready(
        pooling_forward((x2,), dim=dim2, lag=lag2, force_pallas=True)
    )
    assert out2.shape == (B2, lag2, dim2)
    assert jnp.allclose(out2, jnp.max(x2, axis=2)), "Pallas mismatch (D=32)"

    # Tiny-input dispatch path (plain jnp.max, no pallas_call launch overhead).
    out3 = jax.block_until_ready(pooling_forward((x2,), dim=dim2, lag=lag2))
    assert jnp.allclose(out3, jnp.max(x2, axis=2)), "dispatch path mismatch"

    print("KERNEL_OK")
</pallas_src>

<mosaic_0001>
module attributes {stable_mosaic.version = 11 : i64} {
  func.func @_max_pool_kernel(%arg0: i32, %arg1: memref<40x8x128xf32, #tpu.memory_space<vmem>>, %arg2: memref<40x128xf32, #tpu.memory_space<vmem>>) attributes {dimension_semantics = [#tpu.dimension_semantics<parallel>], iteration_bounds = array<i64: 1>, scalar_prefetch = 0 : i64, scratch_operands = 0 : i64, tpu.core_type = #tpu.core_type<tc>, window_params = [{transform_indices = @transform_0, window_bounds = array<i64: 40, 8, 128>}, {transform_indices = @transform_1, window_bounds = array<i64: 40, 128>}]} {
    %c0 = arith.constant 0 : index
    %c0_0 = arith.constant 0 : index
    %c0_1 = arith.constant 0 : index
    %0 = vector.load %arg1[%c0, %c0_0, %c0_1] : memref<40x8x128xf32, #tpu.memory_space<vmem>>, vector<40x1x128xf32>
    %1 = vector.shape_cast %0 : vector<40x1x128xf32> to vector<40x128xf32>
    %c0_2 = arith.constant 0 : index
    %c1 = arith.constant 1 : index
    %c0_3 = arith.constant 0 : index
    %2 = vector.load %arg1[%c0_2, %c1, %c0_3] : memref<40x8x128xf32, #tpu.memory_space<vmem>>, vector<40x1x128xf32>
    %3 = vector.shape_cast %2 : vector<40x1x128xf32> to vector<40x128xf32>
    %4 = arith.maximumf %1, %3 : vector<40x128xf32>
    %c0_4 = arith.constant 0 : index
    %c2 = arith.constant 2 : index
    %c0_5 = arith.constant 0 : index
    %5 = vector.load %arg1[%c0_4, %c2, %c0_5] : memref<40x8x128xf32, #tpu.memory_space<vmem>>, vector<40x1x128xf32>
    %6 = vector.shape_cast %5 : vector<40x1x128xf32> to vector<40x128xf32>
    %7 = arith.maximumf %4, %6 : vector<40x128xf32>
    %c0_6 = arith.constant 0 : index
    %c3 = arith.constant 3 : index
    %c0_7 = arith.constant 0 : index
    %8 = vector.load %arg1[%c0_6, %c3, %c0_7] : memref<40x8x128xf32, #tpu.memory_space<vmem>>, vector<40x1x128xf32>
    %9 = vector.shape_cast %8 : vector<40x1x128xf32> to vector<40x128xf32>
    %10 = arith.maximumf %7, %9 : vector<40x128xf32>
    %c0_8 = arith.constant 0 : index
    %c4 = arith.constant 4 : index
    %c0_9 = arith.constant 0 : index
    %11 = vector.load %arg1[%c0_8, %c4, %c0_9] : memref<40x8x128xf32, #tpu.memory_space<vmem>>, vector<40x1x128xf32>
    %12 = vector.shape_cast %11 : vector<40x1x128xf32> to vector<40x128xf32>
    %13 = arith.maximumf %10, %12 : vector<40x128xf32>
    %c0_10 = arith.constant 0 : index
    %c5 = arith.constant 5 : index
    %c0_11 = arith.constant 0 : index
    %14 = vector.load %arg1[%c0_10, %c5, %c0_11] : memref<40x8x128xf32, #tpu.memory_space<vmem>>, vector<40x1x128xf32>
    %15 = vector.shape_cast %14 : vector<40x1x128xf32> to vector<40x128xf32>
    %16 = arith.maximumf %13, %15 : vector<40x128xf32>
    %c0_12 = arith.constant 0 : index
    %c6 = arith.constant 6 : index
    %c0_13 = arith.constant 0 : index
    %17 = vector.load %arg1[%c0_12, %c6, %c0_13] : memref<40x8x128xf32, #tpu.memory_space<vmem>>, vector<40x1x128xf32>
    %18 = vector.shape_cast %17 : vector<40x1x128xf32> to vector<40x128xf32>
    %19 = arith.maximumf %16, %18 : vector<40x128xf32>
    %c0_14 = arith.constant 0 : index
    %c7 = arith.constant 7 : index
    %c0_15 = arith.constant 0 : index
    %20 = vector.load %arg1[%c0_14, %c7, %c0_15] : memref<40x8x128xf32, #tpu.memory_space<vmem>>, vector<40x1x128xf32>
    %21 = vector.shape_cast %20 : vector<40x1x128xf32> to vector<40x128xf32>
    %22 = arith.maximumf %19, %21 : vector<40x128xf32>
    %c0_16 = arith.constant 0 : index
    %c0_17 = arith.constant 0 : index
    %23 = vector.load %arg2[%c0_16, %c0_17] : memref<40x128xf32, #tpu.memory_space<vmem>>, vector<40x128xf32>
    tpu.vector_store %arg2[%c0_16, %c0_17], %22 {strides = array<i32>} : memref<40x128xf32, #tpu.memory_space<vmem>>, vector<40x128xf32>,
    return
  }
  func.func @transform_0(%arg0: i32) -> (i32, i32, i32) {
    %c0_i32 = arith.constant 0 : i32
    %c0_i32_0 = arith.constant 0 : i32
    %c0_i32_1 = arith.constant 0 : i32
    return %arg0, %c0_i32, %c0_i32_0 : i32, i32, i32
  }
  func.func @transform_1(%arg0: i32) -> (i32, i32) {
    %c0_i32 = arith.constant 0 : i32
    %c0_i32_0 = arith.constant 0 : i32
    return %arg0, %c0_i32 : i32, i32
  }
}

</mosaic_0001>

<llo_original>
// kernel: tpu_custom_call.1
$region0: #{tpu_custom_call.1}
  #allocation0 [shape = 'u32[]', space=smem, size = 0x4, offset = 0x4, fixed_abs, tag = 'smem constant byte address 0x4 - core index']
  #allocation1 [shape = 'u32[144,128]{1,0:T(1,128)}', space=vmem, size = 0x12000, scoped, tag = 'internal scratch']
  %s0 = inlined_call_operand.hbm [shape: f32[40,8,128], index: 0, kind: input, shape index: {}]
  %s1 = inlined_call_operand.hbm [shape: f32[40,128], index: 1, kind: output, shape index: {}]
  %s2 = sld [smem:[#allocation0]]
  $region18: #{tpu_custom_call.1} parent=0
    _
  %s4 = ssub.s32 1, %s2
  %s5 = scalar_select 0, %s4, %s2
  $region1: #{tpu_custom_call.1} parent=0
    #allocation2 [shape = 'u8[163840]{0}', space=vmem, size = 0x28000, scoped, tag = 'input window, operand 0, single buffered']
    #allocation3 [shape = 's32[1]{0}', space=sflag, size = 0x4, scoped, tag = 'scoped memory for tpu_custom_call.1']
    #allocation4 [shape = 's32[1]{0}', space=sflag, size = 0x4, scoped, tag = 'scoped memory for tpu_custom_call.1']
    #allocation5 [shape = 'u8[20480]{0}', space=vmem, size = 0x5000, scoped, tag = 'output window, operand 0, single buffered']
    %6 = vsyncpa [#allocation3], 0
    %7 = vsyncpa [#allocation4], 0
    // Predicated region
    $region2: #{tpu_custom_call.1} parent=1 // pred_check
      _
    $region3: #{tpu_custom_call.1} parent=1 // pred_check_branch
      %9 = sbr.rel (0) target = $region5
    $region4: #{tpu_custom_call.1} parent=1 // pred_region
      %s11 = ssub.s32 5120, 5120
      %12 = vsyncadd [#allocation3], %s11
      %s13 = sshll.u32 [#allocation2], 4
      %s14 = int_to_ptr.vmem [resolvable:$true] %s13
      %19 = dma.hbm_to_vmem [thread:$0]  %s0, 5120, %s14, [#allocation3], 128, 128, 8
    $region5: #{tpu_custom_call.1} parent=1 // pred_fallthru
      _
    // Predicated region
    $region6: #{tpu_custom_call.1} parent=1 // pred_check
      _
    $region7: #{tpu_custom_call.1} parent=1 // pred_check_branch
      %21 = sbr.rel (0) target = $region9
    $region8: #{tpu_custom_call.1} parent=1 // pred_region
      %22 = dma.done [#allocation3], 5120
    $region9: #{tpu_custom_call.1} parent=1 // pred_fallthru
      _
    %v23 = vld [vmem:[#allocation2] sm:$0x1]
    %v24 = vld [vmem:[#allocation2 + $0x8] sm:$0x1]
    %v25 = vld [vmem:[#allocation2 + $0x10] sm:$0x1]
    %v26 = vld [vmem:[#allocation2 + $0x18] sm:$0x1]
    %v27 = vld [vmem:[#allocation2 + $0x20] sm:$0x1]
    %v28 = vld [vmem:[#allocation2 + $0x28] sm:$0x1]
    %v29 = vld [vmem:[#allocation2 + $0x30] sm:$0x1]
    %v30 = vld [vmem:[#allocation2 + $0x38] sm:$0x1]
    %v31 = vld [vmem:[#allocation2 + $0x40] sm:$0x1]
    %v32 = vld [vmem:[#allocation2 + $0x48] sm:$0x1]
    %v33 = vld [vmem:[#allocation2 + $0x50] sm:$0x1]
    %v34 = vld [vmem:[#allocation2 + $0x58] sm:$0x1]
    %v35 = vld [vmem:[#allocation2 + $0x60] sm:$0x1]
    %v36 = vld [vmem:[#allocation2 + $0x68] sm:$0x1]
    %v37 = vld [vmem:[#allocation2 + $0x70] sm:$0x1]
    %v38 = vld [vmem:[#allocation2 + $0x78] sm:$0x1]
    %v39 = vld [vmem:[#allocation2 + $0x80] sm:$0x1]
    %v40 = vld [vmem:[#allocation2 + $0x88] sm:$0x1]
    %v41 = vld [vmem:[#allocation2 + $0x90] sm:$0x1]
    %v42 = vld [vmem:[#allocation2 + $0x98] sm:$0x1]
    %v43 = vld [vmem:[#allocation2 + $0xa0] sm:$0x1]
    %v44 = vld [vmem:[#allocation2 + $0xa8] sm:$0x1]
    %v45 = vld [vmem:[#allocation2 + $0xb0] sm:$0x1]
    %v46 = vld [vmem:[#allocation2 + $0xb8] sm:$0x1]
    %v47 = vld [vmem:[#allocation2 + $0xc0] sm:$0x1]
    %v48 = vld [vmem:[#allocation2 + $0xc8] sm:$0x1]
    %v49 = vld [vmem:[#allocation2 + $0xd0] sm:$0x1]
    %v50 = vld [vmem:[#allocation2 + $0xd8] sm:$0x1]
    %v51 = vld [vmem:[#allocation2 + $0xe0] sm:$0x1]
    %v52 = vld [vmem:[#allocation2 + $0xe8] sm:$0x1]
    %v53 = vld [vmem:[#allocation2 + $0xf0] sm:$0x1]
    %v54 = vld [vmem:[#allocation2 + $0xf8] sm:$0x1]
    %v55 = vld [vmem:[#allocation2 + $0x100] sm:$0x1]
    %v56 = vld [vmem:[#allocation2 + $0x108] sm:$0x1]
    %v57 = vld [vmem:[#allocation2 + $0x110] sm:$0x1]
    %v58 = vld [vmem:[#allocation2 + $0x118] sm:$0x1]
    %v59 = vld [vmem:[#allocation2 + $0x120] sm:$0x1]
    %v60 = vld [vmem:[#allocation2 + $0x128] sm:$0x1]
    %v61 = vld [vmem:[#allocation2 + $0x130] sm:$0x1]
    %v62 = vld [vmem:[#allocation2 + $0x138] sm:$0x1]
    %v63 = vld [vmem:[#allocation2 + $0x1] sm:$0x1]
    %v64 = vld [vmem:[#allocation2 + $0x9] sm:$0x1]
    %v65 = vld [vmem:[#allocation2 + $0x11] sm:$0x1]
    %v66 = vld [vmem:[#allocation2 + $0x19] sm:$0x1]
    %v67 = vld [vmem:[#allocation2 + $0x21] sm:$0x1]
    %v68 = vld [vmem:[#allocation2 + $0x29] sm:$0x1]
    %v69 = vld [vmem:[#allocation2 + $0x31] sm:$0x1]
    %v70 = vld [vmem:[#allocation2 + $0x39] sm:$0x1]
    %v71 = vld [vmem:[#allocation2 + $0x41] sm:$0x1]
    %v72 = vld [vmem:[#allocation2 + $0x49] sm:$0x1]
    %v73 = vld [vmem:[#allocation2 + $0x51] sm:$0x1]
    %v74 = vld [vmem:[#allocation2 + $0x59] sm:$0x1]
    %v75 = vld [vmem:[#allocation2 + $0x61] sm:$0x1]
    %v76 = vld [vmem:[#allocation2 + $0x69] sm:$0x1]
    %v77 = vld [vmem:[#allocation2 + $0x71] sm:$0x1]
    %v78 = vld [vmem:[#allocation2 + $0x79] sm:$0x1]
    %v79 = vld [vmem:[#allocation2 + $0x81] sm:$0x1]
    %v80 = vld [vmem:[#allocation2 + $0x89] sm:$0x1]
    %v81 = vld [vmem:[#allocation2 + $0x91] sm:$0x1]
    %v82 = vld [vmem:[#allocation2 + $0x99] sm:$0x1]
    %v83 = vld [vmem:[#allocation2 + $0xa1] sm:$0x1]
    %v84 = vld [vmem:[#allocation2 + $0xa9] sm:$0x1]
    %v85 = vld [vmem:[#allocation2 + $0xb1] sm:$0x1]
    %v86 = vld [vmem:[#allocation2 + $0xb9] sm:$0x1]
    %v87 = vld [vmem:[#allocation2 + $0xc1] sm:$0x1]
    %v88 = vld [vmem:[#allocation2 + $0xc9] sm:$0x1]
    %v89 = vld [vmem:[#allocation2 + $0xd1] sm:$0x1]
    %v90 = vld [vmem:[#allocation2 + $0xd9] sm:$0x1]
    %v91 = vld [vmem:[#allocation2 + $0xe1] sm:$0x1]
    %v92 = vld [vmem:[#allocation2 + $0xe9] sm:$0x1]
    %v93 = vld [vmem:[#allocation2 + $0xf1] sm:$0x1]
    %v94 = vld [vmem:[#allocation2 + $0xf9] sm:$0x1]
    %v95 = vld [vmem:[#allocation2 + $0x101] sm:$0x1]
    %v96 = vld [vmem:[#allocation2 + $0x109] sm:$0x1]
    %v97 = vld [vmem:[#allocation2 + $0x111] sm:$0x1]
    %v98 = vld [vmem:[#allocation2 + $0x119] sm:$0x1]
    %v99 = vld [vmem:[#allocation2 + $0x121] sm:$0x1]
    %v100 = vld [vmem:[#allocation2 + $0x129] sm:$0x1]
    %v101 = vld [vmem:[#allocation2 + $0x131] sm:$0x1]
    %v102 = vld [vmem:[#allocation2 + $0x139] sm:$0x1]
    %v103 = vmax.f32 %v23, %v63
    %v104 = vmax.f32 %v24, %v64
    %v105 = vmax.f32 %v25, %v65
    %v106 = vmax.f32 %v26, %v66
    %v107 = vmax.f32 %v27, %v67
    %v108 = vmax.f32 %v28, %v68
    %v109 = vmax.f32 %v29, %v69
    %v110 = vmax.f32 %v30, %v70
    %v111 = vmax.f32 %v31, %v71
    %v112 = vmax.f32 %v32, %v72
    %v113 = vmax.f32 %v33, %v73
    %v114 = vmax.f32 %v34, %v74
    %v115 = vmax.f32 %v35, %v75
    %v116 = vmax.f32 %v36, %v76
    %v117 = vmax.f32 %v37, %v77
    %v118 = vmax.f32 %v38, %v78
    %v119 = vmax.f32 %v39, %v79
    %v120 = vmax.f32 %v40, %v80
    %v121 = vmax.f32 %v41, %v81
    %v122 = vmax.f32 %v42, %v82
    %v123 = vmax.f32 %v43, %v83
    %v124 = vmax.f32 %v44, %v84
    %v125 = vmax.f32 %v45, %v85
    %v126 = vmax.f32 %v46, %v86
    %v127 = vmax.f32 %v47, %v87
    %v128 = vmax.f32 %v48, %v88
    %v129 = vmax.f32 %v49, %v89
    %v130 = vmax.f32 %v50, %v90
    %v131 = vmax.f32 %v51, %v91
    %v132 = vmax.f32 %v52, %v92
    %v133 = vmax.f32 %v53, %v93
    %v134 = vmax.f32 %v54, %v94
    %v135 = vmax.f32 %v55, %v95
    %v136 = vmax.f32 %v56, %v96
    %v137 = vmax.f32 %v57, %v97
    %v138 = vmax.f32 %v58, %v98
    %v139 = vmax.f32 %v59, %v99
    %v140 = vmax.f32 %v60, %v100
    %v141 = vmax.f32 %v61, %v101
    %v142 = vmax.f32 %v62, %v102
    %v143 = vld [vmem:[#allocation2 + $0x2] sm:$0x1]
    %v144 = vld [vmem:[#allocation2 + $0xa] sm:$0x1]
    %v145 = vld [vmem:[#allocation2 + $0x12] sm:$0x1]
    %v146 = vld [vmem:[#allocation2 + $0x1a] sm:$0x1]
    %v147 = vld [vmem:[#allocation2 + $0x22] sm:$0x1]
    %v148 = vld [vmem:[#allocation2 + $0x2a] sm:$0x1]
    %v149 = vld [vmem:[#allocation2 + $0x32] sm:$0x1]
    %v150 = vld [vmem:[#allocation2 + $0x3a] sm:$0x1]
    %v151 = vld [vmem:[#allocation2 + $0x42] sm:$0x1]
    %v152 = vld [vmem:[#allocation2 + $0x4a] sm:$0x1]
    %v153 = vld [vmem:[#allocation2 + $0x52] sm:$0x1]
    %v154 = vld [vmem:[#allocation2 + $0x5a] sm:$0x1]
    %v155 = vld [vmem:[#allocation2 + $0x62] sm:$0x1]
    %v156 = vld [vmem:[#allocation2 + $0x6a] sm:$0x1]
    %v157 = vld [vmem:[#allocation2 + $0x72] sm:$0x1]
    %v158 = vld [vmem:[#allocation2 + $0x7a] sm:$0x1]
    %v159 = vld [vmem:[#allocation2 + $0x82] sm:$0x1]
    %v160 = vld [vmem:[#allocation2 + $0x8a] sm:$0x1]
    %v161 = vld [vmem:[#allocation2 + $0x92] sm:$0x1]
    %v162 = vld [vmem:[#allocation2 + $0x9a] sm:$0x1]
    %v163 = vld [vmem:[#allocation2 + $0xa2] sm:$0x1]
    %v164 = vld [vmem:[#allocation2 + $0xaa] sm:$0x1]
    %v165 = vld [vmem:[#allocation2 + $0xb2] sm:$0x1]
    %v166 = vld [vmem:[#allocation2 + $0xba] sm:$0x1]
    %v167 = vld [vmem:[#allocation2 + $0xc2] sm:$0x1]
    %v168 = vld [vmem:[#allocation2 + $0xca] sm:$0x1]
    %v169 = vld [vmem:[#allocation2 + $0xd2] sm:$0x1]
    %v170 = vld [vmem:[#allocation2 + $0xda] sm:$0x1]
    %v171 = vld [vmem:[#allocation2 + $0xe2] sm:$0x1]
    %v172 = vld [vmem:[#allocation2 + $0xea] sm:$0x1]
    %v173 = vld [vmem:[#allocation2 + $0xf2] sm:$0x1]
    %v174 = vld [vmem:[#allocation2 + $0xfa] sm:$0x1]
    %v175 = vld [vmem:[#allocation2 + $0x102] sm:$0x1]
    %v176 = vld [vmem:[#allocation2 + $0x10a] sm:$0x1]
    %v177 = vld [vmem:[#allocation2 + $0x112] sm:$0x1]
    %v178 = vld [vmem:[#allocation2 + $0x11a] sm:$0x1]
    %v179 = vld [vmem:[#allocation2 + $0x122] sm:$0x1]
    %v180 = vld [vmem:[#allocation2 + $0x12a] sm:$0x1]
    %v181 = vld [vmem:[#allocation2 + $0x132] sm:$0x1]
    %v182 = vld [vmem:[#allocation2 + $0x13a] sm:$0x1]
    %v183 = vmax.f32 %v103, %v143
    %v184 = vmax.f32 %v104, %v144
    %v185 = vmax.f32 %v105, %v145
    %v186 = vmax.f32 %v106, %v146
    %v187 = vmax.f32 %v107, %v147
    %v188 = vmax.f32 %v108, %v148
    %v189 = vmax.f32 %v109, %v149
    %v190 = vmax.f32 %v110, %v150
    %v191 = vmax.f32 %v111, %v151
    %v192 = vmax.f32 %v112, %v152
    %v193 = vmax.f32 %v113, %v153
    %v194 = vmax.f32 %v114, %v154
    %v195 = vmax.f32 %v115, %v155
    %v196 = vmax.f32 %v116, %v156
    %v197 = vmax.f32 %v117, %v157
    %v198 = vmax.f32 %v118, %v158
    %v199 = vmax.f32 %v119, %v159
    %v200 = vmax.f32 %v120, %v160
    %v201 = vmax.f32 %v121, %v161
    %v202 = vmax.f32 %v122, %v162
    %v203 = vmax.f32 %v123, %v163
    %v204 = vmax.f32 %v124, %v164
    %v205 = vmax.f32 %v125, %v165
    %v206 = vmax.f32 %v126, %v166
    %v207 = vmax.f32 %v127, %v167
    %v208 = vmax.f32 %v128, %v168
    %v209 = vmax.f32 %v129, %v169
    %v210 = vmax.f32 %v130, %v170
    %v211 = vmax.f32 %v131, %v171
    %v212 = vmax.f32 %v132, %v172
    %v213 = vmax.f32 %v133, %v173
    %v214 = vmax.f32 %v134, %v174
    %v215 = vmax.f32 %v135, %v175
    %v216 = vmax.f32 %v136, %v176
    %v217 = vmax.f32 %v137, %v177
    %v218 = vmax.f32 %v138, %v178
    %v219 = vmax.f32 %v139, %v179
    %v220 = vmax.f32 %v140, %v180
    %v221 = vmax.f32 %v141, %v181
    %v222 = vmax.f32 %v142, %v182
    %v223 = vld [vmem:[#allocation2 + $0x3] sm:$0x1]
    %v224 = vld [vmem:[#allocation2 + $0xb] sm:$0x1]
    %v225 = vld [vmem:[#allocation2 + $0x13] sm:$0x1]
    %v226 = vld [vmem:[#allocation2 + $0x1b] sm:$0x1]
    %v227 = vld [vmem:[#allocation2 + $0x23] sm:$0x1]
    %v228 = vld [vmem:[#allocation2 + $0x2b] sm:$0x1]
    %v229 = vld [vmem:[#allocation2 + $0x33] sm:$0x1]
    %v230 = vld [vmem:[#allocation2 + $0x3b] sm:$0x1]
    %v231 = vld [vmem:[#allocation2 + $0x43] sm:$0x1]
    %v232 = vld [vmem:[#allocation2 + $0x4b] sm:$0x1]
    %v233 = vld [vmem:[#allocation2 + $0x53] sm:$0x1]
    %v234 = vld [vmem:[#allocation2 + $0x5b] sm:$0x1]
    %v235 = vld [vmem:[#allocation2 + $0x63] sm:$0x1]
    %v236 = vld [vmem:[#allocation2 + $0x6b] sm:$0x1]
    %v237 = vld [vmem:[#allocation2 + $0x73] sm:$0x1]
    %v238 = vld [vmem:[#allocation2 + $0x7b] sm:$0x1]
    %v239 = vld [vmem:[#allocation2 + $0x83] sm:$0x1]
    %v240 = vld [vmem:[#allocation2 + $0x8b] sm:$0x1]
    %v241 = vld [vmem:[#allocation2 + $0x93] sm:$0x1]
    %v242 = vld [vmem:[#allocation2 + $0x9b] sm:$0x1]
    %v243 = vld [vmem:[#allocation2 + $0xa3] sm:$0x1]
    %v244 = vld [vmem:[#allocation2 + $0xab] sm:$0x1]
    %v245 = vld [vmem:[#allocation2 + $0xb3] sm:$0x1]
    %v246 = vld [vmem:[#allocation2 + $0xbb] sm:$0x1]
    %v247 = vld [vmem:[#allocation2 + $0xc3] sm:$0x1]
    %v248 = vld [vmem:[#allocation2 + $0xcb] sm:$0x1]
    %v249 = vld [vmem:[#allocation2 + $0xd3] sm:$0x1]
    %v250 = vld [vmem:[#allocation2 + $0xdb] sm:$0x1]
    %v251 = vld [vmem:[#allocation2 + $0xe3] sm:$0x1]
    %v252 = vld [vmem:[#allocation2 + $0xeb] sm:$0x1]
    %v253 = vld [vmem:[#allocation2 + $0xf3] sm:$0x1]
    %v254 = vld [vmem:[#allocation2 + $0xfb] sm:$0x1]
    %v255 = vld [vmem:[#allocation2 + $0x103] sm:$0x1]
    %v256 = vld [vmem:[#allocation2 + $0x10b] sm:$0x1]
    %v257 = vld [vmem:[#allocation2 + $0x113] sm:$0x1]
    %v258 = vld [vmem:[#allocation2 + $0x11b] sm:$0x1]
    %v259 = vld [vmem:[#allocation2 + $0x123] sm:$0x1]
    %v260 = vld [vmem:[#allocation2 + $0x12b] sm:$0x1]
    %v261 = vld [vmem:[#allocation2 + $0x133] sm:$0x1]
    %v262 = vld [vmem:[#allocation2 + $0x13b] sm:$0x1]
    %v263 = vmax.f32 %v183, %v223
    %v264 = vmax.f32 %v184, %v224
    %v265 = vmax.f32 %v185, %v225
    %v266 = vmax.f32 %v186, %v226
    %v267 = vmax.f32 %v187, %v227
    %v268 = vmax.f32 %v188, %v228
    %v269 = vmax.f32 %v189, %v229
    %v270 = vmax.f32 %v190, %v230
    %v271 = vmax.f32 %v191, %v231
    %v272 = vmax.f32 %v192, %v232
    %v273 = vmax.f32 %v193, %v233
    %v274 = vmax.f32 %v194, %v234
    %v275 = vmax.f32 %v195, %v235
    %v276 = vmax.f32 %v196, %v236
    %v277 = vmax.f32 %v197, %v237
    %v278 = vmax.f32 %v198, %v238
    %v279 = vmax.f32 %v199, %v239
    %v280 = vmax.f32 %v200, %v240
    %v281 = vmax.f32 %v201, %v241
    %v282 = vmax.f32 %v202, %v242
    %v283 = vmax.f32 %v203, %v243
    %v284 = vmax.f32 %v204, %v244
    %v285 = vmax.f32 %v205, %v245
    %v286 = vmax.f32 %v206, %v246
    %v287 = vmax.f32 %v207, %v247
    %v288 = vmax.f32 %v208, %v248
    %v289 = vmax.f32 %v209, %v249
    %v290 = vmax.f32 %v210, %v250
    %v291 = vmax.f32 %v211, %v251
    %v292 = vmax.f32 %v212, %v252
    %v293 = vmax.f32 %v213, %v253
    %v294 = vmax.f32 %v214, %v254
    %v295 = vmax.f32 %v215, %v255
    %v296 = vmax.f32 %v216, %v256
    %v297 = vmax.f32 %v217, %v257
    %v298 = vmax.f32 %v218, %v258
    %v299 = vmax.f32 %v219, %v259
    %v300 = vmax.f32 %v220, %v260
    %v301 = vmax.f32 %v221, %v261
    %v302 = vmax.f32 %v222, %v262
    %v303 = vld [vmem:[#allocation2 + $0x4] sm:$0x1]
    %v304 = vld [vmem:[#allocation2 + $0xc] sm:$0x1]
    %v305 = vld [vmem:[#allocation2 + $0x14] sm:$0x1]
    %v306 = vld [vmem:[#allocation2 + $0x1c] sm:$0x1]
    %v307 = vld [vmem:[#allocation2 + $0x24] sm:$0x1]
    %v308 = vld [vmem:[#allocation2 + $0x2c] sm:$0x1]
    %v309 = vld [vmem:[#allocation2 + $0x34] sm:$0x1]
    %v310 = vld [vmem:[#allocation2 + $0x3c] sm:$0x1]
    %v311 = vld [vmem:[#allocation2 + $0x44] sm:$0x1]
    %v312 = vld [vmem:[#allocation2 + $0x4c] sm:$0x1]
    %v313 = vld [vmem:[#allocation2 + $0x54] sm:$0x1]
    %v314 = vld [vmem:[#allocation2 + $0x5c] sm:$0x1]
    %v315 = vld [vmem:[#allocation2 + $0x64] sm:$0x1]
    %v316 = vld [vmem:[#allocation2 + $0x6c] sm:$0x1]
    %v317 = vld [vmem:[#allocation2 + $0x74] sm:$0x1]
    %v318 = vld [vmem:[#allocation2 + $0x7c] sm:$0x1]
    %v319 = vld [vmem:[#allocation2 + $0x84] sm:$0x1]
    %v320 = vld [vmem:[#allocation2 + $0x8c] sm:$0x1]
    %v321 = vld [vmem:[#allocation2 + $0x94] sm:$0x1]
    %v322 = vld [vmem:[#allocation2 + $0x9c] sm:$0x1]
    %v323 = vld [vmem:[#allocation2 + $0xa4] sm:$0x1]
    %v324 = vld [vmem:[#allocation2 + $0xac] sm:$0x1]
    %v325 = vld [vmem:[#allocation2 + $0xb4] sm:$0x1]
    %v326 = vld [vmem:[#allocation2 + $0xbc] sm:$0x1]
    %v327 = vld [vmem:[#allocation2 + $0xc4] sm:$0x1]
    %v328 = vld [vmem:[#allocation2 + $0xcc] sm:$0x1]
    %v329 = vld [vmem:[#allocation2 + $0xd4] sm:$0x1]
    %v330 = vld [vmem:[#allocation2 + $0xdc] sm:$0x1]
    %v331 = vld [vmem:[#allocation2 + $0xe4] sm:$0x1]
    %v332 = vld [vmem:[#allocation2 + $0xec] sm:$0x1]
    %v333 = vld [vmem:[#allocation2 + $0xf4] sm:$0x1]
    %v334 = vld [vmem:[#allocation2 + $0xfc] sm:$0x1]
    %v335 = vld [vmem:[#allocation2 + $0x104] sm:$0x1]
    %v336 = vld [vmem:[#allocation2 + $0x10c] sm:$0x1]
    %v337 = vld [vmem:[#allocation2 + $0x114] sm:$0x1]
    %v338 = vld [vmem:[#allocation2 + $0x11c] sm:$0x1]
    %v339 = vld [vmem:[#allocation2 + $0x124] sm:$0x1]
    %v340 = vld [vmem:[#allocation2 + $0x12c] sm:$0x1]
    %v341 = vld [vmem:[#allocation2 + $0x134] sm:$0x1]
    %v342 = vld [vmem:[#allocation2 + $0x13c] sm:$0x1]
    %v343 = vmax.f32 %v263, %v303
    %v344 = vmax.f32 %v264, %v304
    %v345 = vmax.f32 %v265, %v305
    %v346 = vmax.f32 %v266, %v306
    %v347 = vmax.f32 %v267, %v307
    %v348 = vmax.f32 %v268, %v308
    %v349 = vmax.f32 %v269, %v309
    %v350 = vmax.f32 %v270, %v310
    %v351 = vmax.f32 %v271, %v311
    %v352 = vmax.f32 %v272, %v312
    %v353 = vmax.f32 %v273, %v313
    %v354 = vmax.f32 %v274, %v314
    %v355 = vmax.f32 %v275, %v315
    %v356 = vmax.f32 %v276, %v316
    %v357 = vmax.f32 %v277, %v317
    %v358 = vmax.f32 %v278, %v318
    %v359 = vmax.f32 %v279, %v319
    %v360 = vmax.f32 %v280, %v320
    %v361 = vmax.f32 %v281, %v321
    %v362 = vmax.f32 %v282, %v322
    %v363 = vmax.f32 %v283, %v323
    %v364 = vmax.f32 %v284, %v324
    %v365 = vmax.f32 %v285, %v325
    %v366 = vmax.f32 %v286, %v326
    %v367 = vmax.f32 %v287, %v327
    %v368 = vmax.f32 %v288, %v328
    %v369 = vmax.f32 %v289, %v329
    %v370 = vmax.f32 %v290, %v330
    %v371 = vmax.f32 %v291, %v331
    %v372 = vmax.f32 %v292, %v332
    %v373 = vmax.f32 %v293, %v333
    %v374 = vmax.f32 %v294, %v334
    %v375 = vmax.f32 %v295, %v335
    %v376 = vmax.f32 %v296, %v336
    %v377 = vmax.f32 %v297, %v337
    %v378 = vmax.f32 %v298, %v338
    %v379 = vmax.f32 %v299, %v339
    %v380 = vmax.f32 %v300, %v340
    %v381 = vmax.f32 %v301, %v341
    %v382 = vmax.f32 %v302, %v342
    %v383 = vld [vmem:[#allocation2 + $0x5] sm:$0x1]
    %v384 = vld [vmem:[#allocation2 + $0xd] sm:$0x1]
    %v385 = vld [vmem:[#allocation2 + $0x15] sm:$0x1]
    %v386 = vld [vmem:[#allocation2 + $0x1d] sm:$0x1]
    %v387 = vld [vmem:[#allocation2 + $0x25] sm:$0x1]
    %v388 = vld [vmem:[#allocation2 + $0x2d] sm:$0x1]
    %v389 = vld [vmem:[#allocation2 + $0x35] sm:$0x1]
    %v390 = vld [vmem:[#allocation2 + $0x3d] sm:$0x1]
    %v391 = vld [vmem:[#allocation2 + $0x45] sm:$0x1]
    %v392 = vld [vmem:[#allocation2 + $0x4d] sm:$0x1]
    %v393 = vld [vmem:[#allocation2 + $0x55] sm:$0x1]
    %v394 = vld [vmem:[#allocation2 + $0x5d] sm:$0x1]
    %v395 = vld [vmem:[#allocation2 + $0x65] sm:$0x1]
    %v396 = vld [vmem:[#allocation2 + $0x6d] sm:$0x1]
    %v397 = vld [vmem:[#allocation2 + $0x75] sm:$0x1]
    %v398 = vld [vmem:[#allocation2 + $0x7d] sm:$0x1]
    %v399 = vld [vmem:[#allocation2 + $0x85] sm:$0x1]
    %v400 = vld [vmem:[#allocation2 + $0x8d] sm:$0x1]
    %v401 = vld [vmem:[#allocation2 + $0x95] sm:$0x1]
    %v402 = vld [vmem:[#allocation2 + $0x9d] sm:$0x1]
    %v403 = vld [vmem:[#allocation2 + $0xa5] sm:$0x1]
    %v404 = vld [vmem:[#allocation2 + $0xad] sm:$0x1]
    %v405 = vld [vmem:[#allocation2 + $0xb5] sm:$0x1]
    %v406 = vld [vmem:[#allocation2 + $0xbd] sm:$0x1]
    %v407 = vld [vmem:[#allocation2 + $0xc5] sm:$0x1]
    %v408 = vld [vmem:[#allocation2 + $0xcd] sm:$0x1]
    %v409 = vld [vmem:[#allocation2 + $0xd5] sm:$0x1]
    %v410 = vld [vmem:[#allocation2 + $0xdd] sm:$0x1]
    %v411 = vld [vmem:[#allocation2 + $0xe5] sm:$0x1]
    %v412 = vld [vmem:[#allocation2 + $0xed] sm:$0x1]
    %v413 = vld [vmem:[#allocation2 + $0xf5] sm:$0x1]
    %v414 = vld [vmem:[#allocation2 + $0xfd] sm:$0x1]
    %v415 = vld [vmem:[#allocation2 + $0x105] sm:$0x1]
    %v416 = vld [vmem:[#allocation2 + $0x10d] sm:$0x1]
    %v417 = vld [vmem:[#allocation2 + $0x115] sm:$0x1]
    %v418 = vld [vmem:[#allocation2 + $0x11d] sm:$0x1]
    %v419 = vld [vmem:[#allocation2 + $0x125] sm:$0x1]
    %v420 = vld [vmem:[#allocation2 + $0x12d] sm:$0x1]
    %v421 = vld [vmem:[#allocation2 + $0x135] sm:$0x1]
    %v422 = vld [vmem:[#allocation2 + $0x13d] sm:$0x1]
    %v423 = vmax.f32 %v343, %v383
    %v424 = vmax.f32 %v344, %v384
    %v425 = vmax.f32 %v345, %v385
    %v426 = vmax.f32 %v346, %v386
    %v427 = vmax.f32 %v347, %v387
    %v428 = vmax.f32 %v348, %v388
    %v429 = vmax.f32 %v349, %v389
    %v430 = vmax.f32 %v350, %v390
    %v431 = vmax.f32 %v351, %v391
    %v432 = vmax.f32 %v352, %v392
    %v433 = vmax.f32 %v353, %v393
    %v434 = vmax.f32 %v354, %v394
    %v435 = vmax.f32 %v355, %v395
    %v436 = vmax.f32 %v356, %v396
    %v437 = vmax.f32 %v357, %v397
    %v438 = vmax.f32 %v358, %v398
    %v439 = vmax.f32 %v359, %v399
    %v440 = vmax.f32 %v360, %v400
    %v441 = vmax.f32 %v361, %v401
    %v442 = vmax.f32 %v362, %v402
    %v443 = vmax.f32 %v363, %v403
    %v444 = vmax.f32 %v364, %v404
    %v445 = vmax.f32 %v365, %v405
    %v446 = vmax.f32 %v366, %v406
    %v447 = vmax.f32 %v367, %v407
    %v448 = vmax.f32 %v368, %v408
    %v449 = vmax.f32 %v369, %v409
    %v450 = vmax.f32 %v370, %v410
    %v451 = vmax.f32 %v371, %v411
    %v452 = vmax.f32 %v372, %v412
    %v453 = vmax.f32 %v373, %v413
    %v454 = vmax.f32 %v374, %v414
    %v455 = vmax.f32 %v375, %v415
    %v456 = vmax.f32 %v376, %v416
    %v457 = vmax.f32 %v377, %v417
    %v458 = vmax.f32 %v378, %v418
    %v459 = vmax.f32 %v379, %v419
    %v460 = vmax.f32 %v380, %v420
    %v461 = vmax.f32 %v381, %v421
    %v462 = vmax.f32 %v382, %v422
    %v463 = vld [vmem:[#allocation2 + $0x6] sm:$0x1]
    %v464 = vld [vmem:[#allocation2 + $0xe] sm:$0x1]
    %v465 = vld [vmem:[#allocation2 + $0x16] sm:$0x1]
    %v466 = vld [vmem:[#allocation2 + $0x1e] sm:$0x1]
    %v467 = vld [vmem:[#allocation2 + $0x26] sm:$0x1]
    %v468 = vld [vmem:[#allocation2 + $0x2e] sm:$0x1]
    %v469 = vld [vmem:[#allocation2 + $0x36] sm:$0x1]
    %v470 = vld [vmem:[#allocation2 + $0x3e] sm:$0x1]
    %v471 = vld [vmem:[#allocation2 + $0x46] sm:$0x1]
    %v472 = vld [vmem:[#allocation2 + $0x4e] sm:$0x1]
    %v473 = vld [vmem:[#allocation2 + $0x56] sm:$0x1]
    %v474 = vld [vmem:[#allocation2 + $0x5e] sm:$0x1]
    %v475 = vld [vmem:[#allocation2 + $0x66] sm:$0x1]
    %v476 = vld [vmem:[#allocation2 + $0x6e] sm:$0x1]
    %v477 = vld [vmem:[#allocation2 + $0x76] sm:$0x1]
    %v478 = vld [vmem:[#allocation2 + $0x7e] sm:$0x1]
    %v479 = vld [vmem:[#allocation2 + $0x86] sm:$0x1]
    %v480 = vld [vmem:[#allocation2 + $0x8e] sm:$0x1]
    %v481 = vld [vmem:[#allocation2 + $0x96] sm:$0x1]
    %v482 = vld [vmem:[#allocation2 + $0x9e] sm:$0x1]
    %v483 = vld [vmem:[#allocation2 + $0xa6] sm:$0x1]
    %v484 = vld [vmem:[#allocation2 + $0xae] sm:$0x1]
    %v485 = vld [vmem:[#allocation2 + $0xb6] sm:$0x1]
    %v486 = vld [vmem:[#allocation2 + $0xbe] sm:$0x1]
    %v487 = vld [vmem:[#allocation2 + $0xc6] sm:$0x1]
    %v488 = vld [vmem:[#allocation2 + $0xce] sm:$0x1]
    %v489 = vld [vmem:[#allocation2 + $0xd6] sm:$0x1]
    %v490 = vld [vmem:[#allocation2 + $0xde] sm:$0x1]
    %v491 = vld [vmem:[#allocation2 + $0xe6] sm:$0x1]
    %v492 = vld [vmem:[#allocation2 + $0xee] sm:$0x1]
    %v493 = vld [vmem:[#allocation2 + $0xf6] sm:$0x1]
    %v494 = vld [vmem:[#allocation2 + $0xfe] sm:$0x1]
    %v495 = vld [vmem:[#allocation2 + $0x106] sm:$0x1]
    %v496 = vld [vmem:[#allocation2 + $0x10e] sm:$0x1]
    %v497 = vld [vmem:[#allocation2 + $0x116] sm:$0x1]
    %v498 = vld [vmem:[#allocation2 + $0x11e] sm:$0x1]
    %v499 = vld [vmem:[#allocation2 + $0x126] sm:$0x1]
    %v500 = vld [vmem:[#allocation2 + $0x12e] sm:$0x1]
    %v501 = vld [vmem:[#allocation2 + $0x136] sm:$0x1]
    %v502 = vld [vmem:[#allocation2 + $0x13e] sm:$0x1]
    %v503 = vmax.f32 %v423, %v463
    %v504 = vmax.f32 %v424, %v464
    %v505 = vmax.f32 %v425, %v465
    %v506 = vmax.f32 %v426, %v466
    %v507 = vmax.f32 %v427, %v467
    %v508 = vmax.f32 %v428, %v468
    %v509 = vmax.f32 %v429, %v469
    %v510 = vmax.f32 %v430, %v470
    %v511 = vmax.f32 %v431, %v471
    %v512 = vmax.f32 %v432, %v472
    %v513 = vmax.f32 %v433, %v473
    %v514 = vmax.f32 %v434, %v474
    %v515 = vmax.f32 %v435, %v475
    %v516 = vmax.f32 %v436, %v476
    %v517 = vmax.f32 %v437, %v477
    %v518 = vmax.f32 %v438, %v478
    %v519 = vmax.f32 %v439, %v479
    %v520 = vmax.f32 %v440, %v480
    %v521 = vmax.f32 %v441, %v481
    %v522 = vmax.f32 %v442, %v482
    %v523 = vmax.f32 %v443, %v483
    %v524 = vmax.f32 %v444, %v484
    %v525 = vmax.f32 %v445, %v485
    %v526 = vmax.f32 %v446, %v486
    %v527 = vmax.f32 %v447, %v487
    %v528 = vmax.f32 %v448, %v488
    %v529 = vmax.f32 %v449, %v489
    %v530 = vmax.f32 %v450, %v490
    %v531 = vmax.f32 %v451, %v491
    %v532 = vmax.f32 %v452, %v492
    %v533 = vmax.f32 %v453, %v493
    %v534 = vmax.f32 %v454, %v494
    %v535 = vmax.f32 %v455, %v495
    %v536 = vmax.f32 %v456, %v496
    %v537 = vmax.f32 %v457, %v497
    %v538 = vmax.f32 %v458, %v498
    %v539 = vmax.f32 %v459, %v499
    %v540 = vmax.f32 %v460, %v500
    %v541 = vmax.f32 %v461, %v501
    %v542 = vmax.f32 %v462, %v502
    %v543 = vld [vmem:[#allocation2 + $0x7] sm:$0x1]
    %v544 = vld [vmem:[#allocation2 + $0xf] sm:$0x1]
    %v545 = vld [vmem:[#allocation2 + $0x17] sm:$0x1]
    %v546 = vld [vmem:[#allocation2 + $0x1f] sm:$0x1]
    %v547 = vld [vmem:[#allocation2 + $0x27] sm:$0x1]
    %v548 = vld [vmem:[#allocation2 + $0x2f] sm:$0x1]
    %v549 = vld [vmem:[#allocation2 + $0x37] sm:$0x1]
    %v550 = vld [vmem:[#allocation2 + $0x3f] sm:$0x1]
    %v551 = vld [vmem:[#allocation2 + $0x47] sm:$0x1]
    %v552 = vld [vmem:[#allocation2 + $0x4f] sm:$0x1]
    %v553 = vld [vmem:[#allocation2 + $0x57] sm:$0x1]
    %v554 = vld [vmem:[#allocation2 + $0x5f] sm:$0x1]
    %v555 = vld [vmem:[#allocation2 + $0x67] sm:$0x1]
    %v556 = vld [vmem:[#allocation2 + $0x6f] sm:$0x1]
    %v557 = vld [vmem:[#allocation2 + $0x77] sm:$0x1]
    %v558 = vld [vmem:[#allocation2 + $0x7f] sm:$0x1]
    %v559 = vld [vmem:[#allocation2 + $0x87] sm:$0x1]
    %v560 = vld [vmem:[#allocation2 + $0x8f] sm:$0x1]
    %v561 = vld [vmem:[#allocation2 + $0x97] sm:$0x1]
    %v562 = vld [vmem:[#allocation2 + $0x9f] sm:$0x1]
    %v563 = vld [vmem:[#allocation2 + $0xa7] sm:$0x1]
    %v564 = vld [vmem:[#allocation2 + $0xaf] sm:$0x1]
    %v565 = vld [vmem:[#allocation2 + $0xb7] sm:$0x1]
    %v566 = vld [vmem:[#allocation2 + $0xbf] sm:$0x1]
    %v567 = vld [vmem:[#allocation2 + $0xc7] sm:$0x1]
    %v568 = vld [vmem:[#allocation2 + $0xcf] sm:$0x1]
    %v569 = vld [vmem:[#allocation2 + $0xd7] sm:$0x1]
    %v570 = vld [vmem:[#allocation2 + $0xdf] sm:$0x1]
    %v571 = vld [vmem:[#allocation2 + $0xe7] sm:$0x1]
    %v572 = vld [vmem:[#allocation2 + $0xef] sm:$0x1]
    %v573 = vld [vmem:[#allocation2 + $0xf7] sm:$0x1]
    %v574 = vld [vmem:[#allocation2 + $0xff] sm:$0x1]
    %v575 = vld [vmem:[#allocation2 + $0x107] sm:$0x1]
    %v576 = vld [vmem:[#allocation2 + $0x10f] sm:$0x1]
    %v577 = vld [vmem:[#allocation2 + $0x117] sm:$0x1]
    %v578 = vld [vmem:[#allocation2 + $0x11f] sm:$0x1]
    %v579 = vld [vmem:[#allocation2 + $0x127] sm:$0x1]
    %v580 = vld [vmem:[#allocation2 + $0x12f] sm:$0x1]
    %v581 = vld [vmem:[#allocation2 + $0x137] sm:$0x1]
    %v582 = vld [vmem:[#allocation2 + $0x13f] sm:$0x1]
    %v583 = vmax.f32 %v503, %v543
    %v584 = vmax.f32 %v504, %v544
    %v585 = vmax.f32 %v505, %v545
    %v586 = vmax.f32 %v506, %v546
    %v587 = vmax.f32 %v507, %v547
    %v588 = vmax.f32 %v508, %v548
    %v589 = vmax.f32 %v509, %v549
    %v590 = vmax.f32 %v510, %v550
    %v591 = vmax.f32 %v511, %v551
    %v592 = vmax.f32 %v512, %v552
    %v593 = vmax.f32 %v513, %v553
    %v594 = vmax.f32 %v514, %v554
    %v595 = vmax.f32 %v515, %v555
    %v596 = vmax.f32 %v516, %v556
    %v597 = vmax.f32 %v517, %v557
    %v598 = vmax.f32 %v518, %v558
    %v599 = vmax.f32 %v519, %v559
    %v600 = vmax.f32 %v520, %v560
    %v601 = vmax.f32 %v521, %v561
    %v602 = vmax.f32 %v522, %v562
    %v603 = vmax.f32 %v523, %v563
    %v604 = vmax.f32 %v524, %v564
    %v605 = vmax.f32 %v525, %v565
    %v606 = vmax.f32 %v526, %v566
    %v607 = vmax.f32 %v527, %v567
    %v608 = vmax.f32 %v528, %v568
    %v609 = vmax.f32 %v529, %v569
    %v610 = vmax.f32 %v530, %v570
    %v611 = vmax.f32 %v531, %v571
    %v612 = vmax.f32 %v532, %v572
    %v613 = vmax.f32 %v533, %v573
    %v614 = vmax.f32 %v534, %v574
    %v615 = vmax.f32 %v535, %v575
    %v616 = vmax.f32 %v536, %v576
    %v617 = vmax.f32 %v537, %v577
    %v618 = vmax.f32 %v538, %v578
    %v619 = vmax.f32 %v539, %v579
    %v620 = vmax.f32 %v540, %v580
    %v621 = vmax.f32 %v541, %v581
    %v622 = vmax.f32 %v542, %v582
    %v663 = vrot.slane %v584, 7
    %vm664 = vcmask 1041409
    %v665 = vsel %vm664, %v663, %v583
    %v666 = vrot.slane %v585, 6
    %vm667 = vcmask 1042434
    %v668 = vsel %vm667, %v666, %v665
    %v669 = vrot.slane %v586, 5
    %vm670 = vcmask 1043459
    %v671 = vsel %vm670, %v669, %v668
    %v672 = vrot.slane %v587, 4
    %vm673 = vcmask 1044484
    %v674 = vsel %vm673, %v672, %v671
    %v675 = vrot.slane %v588, 3
    %vm676 = vcmask 1045509
    %v677 = vsel %vm676, %v675, %v674
    %v678 = vrot.slane %v589, 2
    %vm679 = vcmask 1046534
    %v680 = vsel %vm679, %v678, %v677
    %v681 = vrot.slane %v590, 1
    %vm682 = vcmask 1047559
    %v683 = vsel %vm682, %v681, %v680
    %v684 = vrot.slane %v592, 7
    %v685 = vsel %vm664, %v684, %v591
    %v686 = vrot.slane %v593, 6
    %v687 = vsel %vm667, %v686, %v685
    %v688 = vrot.slane %v594, 5
    %v689 = vsel %vm670, %v688, %v687
    %v690 = vrot.slane %v595, 4
    %v691 = vsel %vm673, %v690, %v689
    %v692 = vrot.slane %v596, 3
    %v693 = vsel %vm676, %v692, %v691
    %v694 = vrot.slane %v597, 2
    %v695 = vsel %vm679, %v694, %v693
    %v696 = vrot.slane %v598, 1
    %v697 = vsel %vm682, %v696, %v695
    %v698 = vrot.slane %v600, 7
    %v699 = vsel %vm664, %v698, %v599
    %v700 = vrot.slane %v601, 6
    %v701 = vsel %vm667, %v700, %v699
    %v702 = vrot.slane %v602, 5
    %v703 = vsel %vm670, %v702, %v701
    %v704 = vrot.slane %v603, 4
    %v705 = vsel %vm673, %v704, %v703
    %v706 = vrot.slane %v604, 3
    %v707 = vsel %vm676, %v706, %v705
    %v708 = vrot.slane %v605, 2
    %v709 = vsel %vm679, %v708, %v707
    %v710 = vrot.slane %v606, 1
    %v711 = vsel %vm682, %v710, %v709
    %v712 = vrot.slane %v608, 7
    %v713 = vsel %vm664, %v712, %v607
    %v714 = vrot.slane %v609, 6
    %v715 = vsel %vm667, %v714, %v713
    %v716 = vrot.slane %v610, 5
    %v717 = vsel %vm670, %v716, %v715
    %v718 = vrot.slane %v611, 4
    %v719 = vsel %vm673, %v718, %v717
    %v720 = vrot.slane %v612, 3
    %v721 = vsel %vm676, %v720, %v719
    %v722 = vrot.slane %v613, 2
    %v723 = vsel %vm679, %v722, %v721
    %v724 = vrot.slane %v614, 1
    %v725 = vsel %vm682, %v724, %v723
    %v726 = vrot.slane %v616, 7
    %v727 = vsel %vm664, %v726, %v615
    %v728 = vrot.slane %v617, 6
    %v729 = vsel %vm667, %v728, %v727
    %v730 = vrot.slane %v618, 5
    %v731 = vsel %vm670, %v730, %v729
    %v732 = vrot.slane %v619, 4
    %v733 = vsel %vm673, %v732, %v731
    %v734 = vrot.slane %v620, 3
    %v735 = vsel %vm676, %v734, %v733
    %v736 = vrot.slane %v621, 2
    %v737 = vsel %vm679, %v736, %v735
    %v738 = vrot.slane %v622, 1
    %v739 = vsel %vm682, %v738, %v737
    %745 = vst [vmem:[#allocation5] sm:$0xff] %v683
    %746 = vst [vmem:[#allocation5 + $0x8] sm:$0xff] %v697
    %747 = vst [vmem:[#allocation5 + $0x10] sm:$0xff] %v711
    %748 = vst [vmem:[#allocation5 + $0x18] sm:$0xff] %v725
    %749 = vst [vmem:[#allocation5 + $0x20] sm:$0xff] %v739
    // Predicated region
    $region10: #{tpu_custom_call.1} parent=1 // pred_check
      _
    $region11: #{tpu_custom_call.1} parent=1 // pred_check_branch
      %751 = sbr.rel (0) target = $region13
    $region12: #{tpu_custom_call.1} parent=1 // pred_region
      %s753 = ssub.s32 640, 640
      %754 = vsyncadd [#allocation4], %s753
      %s755 = sshll.u32 [#allocation5], 4
      %s756 = int_to_ptr.vmem [resolvable:$true] %s755
      %761 = dma.vmem_to_hbm [thread:$0]  %s756, 640, %s1, [#allocation4], 128, 128, 8
    $region13: #{tpu_custom_call.1} parent=1 // pred_fallthru
      _
    // Predicated region
    $region14: #{tpu_custom_call.1} parent=1 // pred_check
      _
    $region15: #{tpu_custom_call.1} parent=1 // pred_check_branch
      %763 = sbr.rel (0) target = $region17
    $region16: #{tpu_custom_call.1} parent=1 // pred_region
      %764 = dma.done [#allocation4], 640
    $region17: #{tpu_custom_call.1} parent=1 // pred_fallthru
      _
    %765 = vsyncpa [#allocation3], 1
    %766 = vsyncpa [#allocation4], 1

</llo_original>
